<compile_context>
chip_gen: v7x
topology: tpu7x:2x2x1
jax: 0.10.0
libtpu: 0.0.40
codegen_flags: <defaults>
</compile_context>

<pallas_src>
import functools
import math

import jax
import jax.numpy as jnp
from jax.experimental import pallas as pl
from jax.experimental.pallas import tpu as pltpu


# ---------------------------------------------------------------------------
# Generation-aware sizing helpers
# ---------------------------------------------------------------------------
def _round_up(x, mult):
    return ((x + mult - 1) // mult) * mult


def _sublane(dtype):
    return {4: 8, 2: 16, 1: 32}.get(jnp.dtype(dtype).itemsize, 8)


@functools.lru_cache(maxsize=None)
def _vmem_capacity_bytes():
    try:
        cap = int(getattr(pltpu.get_tpu_info(), "vmem_capacity_bytes", 0))
        if cap > 0:
            return cap
    except Exception:
        pass
    return 64 * 1024 * 1024            # conservative fallback (v7x per-TC physical)


@functools.lru_cache(maxsize=None)
def _device_kind():
    try:
        return jax.devices()[0].device_kind.lower()
    except Exception:
        return ""


@functools.lru_cache(maxsize=None)
def _vmem_limit_bytes():
    # 3/4 of physical VMEM: ~96 MiB on v5e/v6e (128 MiB), ~48 MiB on v7x (64 MiB).
    return min(_vmem_capacity_bytes() * 3 // 4, 112 * 1024 * 1024)


@functools.lru_cache(maxsize=None)
def _fused_width_threshold():
    # Block-diag wastes p x MXU flops but removes two full HBM activation
    # transposes; the crossover is much higher on v6e/v7x (918/996 TF/s,
    # 1.4/3.2 TB/s HBM) than on v5e's 128-wide 197 TF/s MXU.
    kind = _device_kind()
    if "v5e" in kind or "v5 lite" in kind or "v5lite" in kind:
        return 512
    return 2048


def _pick_batch_tile(B, cap_rows, sublane):
    """Return (tile_rows, padded_B).  Prefers tiles that divide B exactly
    (no batch padding, no post-kernel slice); splits into >=2 grid steps when
    B is large enough so both v7x TensorCores get work."""
    cap_rows = max(sublane, min(cap_rows, 4096) // sublane * sublane)
    if B <= cap_rows:
        half = B // 2
        if B >= 256 and B % 2 == 0 and half % sublane == 0:
            return half, B                       # 2 grid steps, no padding
        return B, B                              # one full-extent tile (always legal)
    for cand in range(cap_rows, sublane - 1, -sublane):
        if B % cand == 0:
            return cand, B                       # exact divisor, no padding
    return cap_rows, _round_up(B, cap_rows)      # pad batch, slice afterwards


# ---------------------------------------------------------------------------
# Path 1: block-diagonal fused matmul — no activation transposes, lane-dense.
# ---------------------------------------------------------------------------
def _blockdiag_kernel(x_ref, w_ref, b_ref, o_ref):
    # x_ref: (TB, n*p)  w_ref: (n*p, mp_pad)  b_ref: (1, mp_pad)  o_ref: (TB, mp_pad)
    acc = jnp.dot(x_ref[...], w_ref[...], preferred_element_type=jnp.float32)
    o_ref[...] = (acc + b_ref[...].astype(jnp.float32)).astype(o_ref.dtype)


def _make_blockdiag_params(W, b, mp_pad):
    # TODO(synk): in a real model precompute these once per parameter update
    # (pure function of W, b) instead of on every forward call.
    p, m, n = W.shape
    mp = m * p
    eye = jnp.eye(p, dtype=W.dtype)                              # (p, p)
    # w4[n_i, p_i, m_i, p_j] = W[p_i, m_i, n_i] * eye[p_i, p_j]
    w4 = jnp.transpose(W, (2, 0, 1))[:, :, :, None] * eye[None, :, None, :]
    w_bd = w4.reshape(n * p, mp)
    b_flat = jnp.transpose(b, (1, 0)).reshape(1, mp)
    if mp_pad != mp:
        w_bd = jnp.pad(w_bd, ((0, 0), (0, mp_pad - mp)))
        b_flat = jnp.pad(b_flat, ((0, 0), (0, mp_pad - mp)))
    return w_bd, b_flat


def _forward_blockdiag(x_3d, W, b, batch_dims):
    p, m, n = W.shape
    B = x_3d.shape[0]
    np_ = n * p
    mp = m * p
    mp_pad = _round_up(mp, 128)                  # lane-dense output (unmasked vst)
    dtype = x_3d.dtype
    itemsize = jnp.dtype(dtype).itemsize
    sub = _sublane(dtype)

    w_bd, b_flat = _make_blockdiag_params(W.astype(dtype), b.astype(dtype), mp_pad)
    x_flat = x_3d.reshape(B, np_)                # contiguous reshape: free

    # VMEM accounting: constant-index weight/bias blocks still get 2 pipeline
    # buffers; activations (in + out) are double-buffered streams.
    # TODO(synk): switch the constant-index W/b specs to pipeline_mode=
    # pl.Buffered(1) once single-buffering is verified on the target jax.
    budget = _vmem_limit_bytes() - 8 * 1024 * 1024
    resident = 2 * (np_ * mp_pad + mp_pad) * itemsize
    per_row = 2 * (np_ + mp_pad) * itemsize
    cap_rows = max(sub, (budget - resident) // per_row)
    tb, b_pad = _pick_batch_tile(B, cap_rows, sub)
    if b_pad != B:
        x_flat = jnp.pad(x_flat, ((0, b_pad - B), (0, 0)))

    flops = 2 * b_pad * np_ * mp_pad             # executed flops (incl. p-x overcount)
    bytes_accessed = (b_pad * np_ + np_ * mp_pad + mp_pad + b_pad * mp_pad) * itemsize

    out = pl.pallas_call(
        _blockdiag_kernel,
        out_shape=jax.ShapeDtypeStruct((b_pad, mp_pad), dtype),
        grid_spec=pltpu.PrefetchScalarGridSpec(
            num_scalar_prefetch=0,
            grid=(b_pad // tb,),
            in_specs=[
                pl.BlockSpec((tb, np_), lambda i: (i, 0)),
                pl.BlockSpec((np_, mp_pad), lambda i: (0, 0)),   # resident across grid
                pl.BlockSpec((1, mp_pad), lambda i: (0, 0)),     # resident across grid
            ],
            out_specs=pl.BlockSpec((tb, mp_pad), lambda i: (i, 0)),
        ),
        compiler_params=pltpu.CompilerParams(
            dimension_semantics=("parallel",),
            vmem_limit_bytes=_vmem_limit_bytes(),
        ),
        cost_estimate=pl.CostEstimate(
            flops=flops, transcendentals=0, bytes_accessed=bytes_accessed),
    )(x_flat, w_bd, b_flat)

    if b_pad != B:
        out = out[:B]
    if mp_pad != mp:
        out = out[:, :mp]
    return out.reshape(*batch_dims, m, p)


# ---------------------------------------------------------------------------
# Path 2: p-major tiled kernel — W kept in native (p, m, n) layout (trans_b),
# m dim zero-padded to 128 so output stores are lane-dense.
# ---------------------------------------------------------------------------
def _pmajor_kernel(x_ref, w_ref, b_ref, o_ref):
    # x_ref: (1, TB, n)  w_ref: (1, m_pad, n)  b_ref: (1, 1, m_pad)  o_ref: (1, TB, m_pad)
    acc = jax.lax.dot_general(
        x_ref[0], w_ref[0],
        dimension_numbers=(((1,), (1,)), ((), ())),   # contract on n (trans_b matmul)
        preferred_element_type=jnp.float32,
    )
    o_ref[0] = (acc + b_ref[0].astype(jnp.float32)).astype(o_ref.dtype)


def _forward_pmajor(x_3d, W, b, batch_dims):
    p, m, n = W.shape
    B = x_3d.shape[0]
    dtype = x_3d.dtype
    itemsize = jnp.dtype(dtype).itemsize
    sub = _sublane(dtype)
    m_pad = _round_up(m, 128)                    # lane-dense output stores

    W_p = W.astype(dtype)
    b_p = b.astype(dtype).reshape(p, 1, m)
    if m_pad != m:
        W_p = jnp.pad(W_p, ((0, 0), (0, m_pad - m), (0, 0)))    # zero rows: only flops
        b_p = jnp.pad(b_p, ((0, 0), (0, 0), (0, m_pad - m)))

    # TODO(synk): these two wrapper transposes are extra HBM passes over the
    # activations; the block-diagonal path (no transposes) is preferred for all
    # shapes below the fused-width threshold.
    x_pm = jnp.transpose(x_3d, (2, 0, 1))        # (p, B, n)

    # VMEM accounting includes the double-buffered (1, m_pad, n) weight tile.
    budget = _vmem_limit_bytes() - 8 * 1024 * 1024
    resident = 2 * (m_pad * n + m_pad) * itemsize
    per_row = 2 * (n + m_pad) * itemsize
    cap_rows = max(sub, (budget - resident) // per_row)
    tb, b_pad = _pick_batch_tile(B, cap_rows, sub)
    if b_pad != B:
        x_pm = jnp.pad(x_pm, ((0, 0), (0, b_pad - B), (0, 0)))

    # TODO(synk): for very large m/n additionally tile m and n (n reduction
    # axis last in the grid marked "arbitrary", f32 VMEM accumulator with
    # pl.when init/finalize; 256-wide tiles on v6e/v7x, 128 on v5e).

    flops = 2 * p * b_pad * n * m_pad
    bytes_accessed = (p * b_pad * n + p * m_pad * n + p * m_pad
                      + p * b_pad * m_pad) * itemsize

    out_pm = pl.pallas_call(
        _pmajor_kernel,
        out_shape=jax.ShapeDtypeStruct((p, b_pad, m_pad), dtype),
        grid_spec=pltpu.PrefetchScalarGridSpec(
            num_scalar_prefetch=0,
            grid=(p, b_pad // tb),               # B innermost: weight resident per p
            in_specs=[
                pl.BlockSpec((1, tb, n), lambda pi, bi: (pi, bi, 0)),
                pl.BlockSpec((1, m_pad, n), lambda pi, bi: (pi, 0, 0)),
                pl.BlockSpec((1, 1, m_pad), lambda pi, bi: (pi, 0, 0)),
            ],
            out_specs=pl.BlockSpec((1, tb, m_pad), lambda pi, bi: (pi, bi, 0)),
        ),
        compiler_params=pltpu.CompilerParams(
            dimension_semantics=("parallel", "parallel"),
            vmem_limit_bytes=_vmem_limit_bytes(),
        ),
        cost_estimate=pl.CostEstimate(
            flops=flops, transcendentals=0, bytes_accessed=bytes_accessed),
    )(x_pm, W_p, b_p)

    if b_pad != B or m_pad != m:
        out_pm = out_pm[:, :B, :m]
    y = jnp.transpose(out_pm, (1, 2, 0))         # (B, m, p)
    return y.reshape(*batch_dims, m, p)


# ---------------------------------------------------------------------------
# Public forward
# ---------------------------------------------------------------------------
def _use_blockdiag(n, m, p, itemsize):
    np_, mp = n * p, m * p
    mp_pad = _round_up(mp, 128)
    if max(np_, mp) > _fused_width_threshold():
        return False
    budget = _vmem_limit_bytes() - 8 * 1024 * 1024
    # The double-buffered fused weight must leave >= half the budget for tiles.
    return 2 * np_ * mp_pad * itemsize <= budget // 2


@functools.partial(jax.jit, static_argnames=("path",))
def parallel_linear(x, W, b, path=None):
    """x: (..., n, p), W: (p, m, n), b: (p, m) -> y: (..., m, p)."""
    p, m, n = W.shape
    assert x.shape[-2] == n, f"Input size of model '{n}' does not match input size of data '{x.shape[-2]}'"
    assert x.shape[-1] == p, f"Batch size of model '{p}' does not match batch size of data '{x.shape[-1]}'"

    batch_dims = x.shape[:-2]
    B = math.prod(batch_dims) if batch_dims else 1
    x_3d = x.reshape(B, n, p)

    if path is None:
        path = "blockdiag" if _use_blockdiag(n, m, p, jnp.dtype(x.dtype).itemsize) else "pmajor"
    if path == "blockdiag":
        return _forward_blockdiag(x_3d, W, b, batch_dims)
    return _forward_pmajor(x_3d, W, b, batch_dims)


def init_parallel_linear_params(key, n_inputs, n_outputs, n_parallel, dtype=jnp.float32):
    """Matches PyTorch reset_parameters:
       kaiming_uniform_(a=sqrt(5)) on each (m, n) slice -> U(-1/sqrt(n), 1/sqrt(n));
       bias: U(-1/sqrt(fan_in), 1/sqrt(fan_in)), fan_in = n."""
    kw, kb = jax.random.split(key)
    bound = 1.0 / math.sqrt(n_inputs) if n_inputs > 0 else 0.0
    W = jax.random.uniform(
        kw, (n_parallel, n_outputs, n_inputs), dtype=dtype, minval=-bound, maxval=bound)
    b = jax.random.uniform(
        kb, (n_parallel, n_outputs), dtype=dtype, minval=-bound, maxval=bound)
    return W, b


def _check(y, x, W, b):
    p, m, n = W.shape
    y_ref = jnp.einsum('pmn,...np->...mp', W, x) + b.T.reshape(1, 1, m, p)
    assert y.shape == y_ref.shape, (y.shape, y_ref.shape)
    err = float(jnp.max(jnp.abs(y - y_ref)))
    assert jnp.allclose(y, y_ref, atol=1e-5, rtol=1e-5), err


if __name__ == "__main__":
    key = jax.random.PRNGKey(0)

    # --- Test 1: small FunctionEncoder shapes, auto path (block-diagonal) ----
    k_params, k_x, key = jax.random.split(key, 3)
    W, b = init_parallel_linear_params(k_params, 32, 16, 4)
    x = jax.random.normal(k_x, (2, 8, 32, 4), dtype=jnp.float32)
    y = jax.block_until_ready(parallel_linear(x, W, b))
    _check(y, x, W, b)

    # --- Test 2: forced p-major path (exercises m=80 -> m_pad=128 padding) ---
    k_params, k_x, key = jax.random.split(key, 3)
    W2, b2 = init_parallel_linear_params(k_params, 96, 80, 6)
    x2 = jax.random.normal(k_x, (2, 24, 96, 6), dtype=jnp.float32)
    y2 = jax.block_until_ready(parallel_linear(x2, W2, b2, path="pmajor"))
    _check(y2, x2, W2, b2)

    # --- Test 3: forced block-diag with odd batch (full-extent tile + slice) -
    k_params, k_x, key = jax.random.split(key, 3)
    W3, b3 = init_parallel_linear_params(k_params, 40, 24, 5)
    x3 = jax.random.normal(k_x, (3, 5, 40, 5), dtype=jnp.float32)
    y3 = jax.block_until_ready(parallel_linear(x3, W3, b3, path="blockdiag"))
    _check(y3, x3, W3, b3)

    # --- Test 4: larger batch, auto path -> >=2 grid steps (v7x megacore) ----
    k_params, k_x, key = jax.random.split(key, 3)
    W4, b4 = init_parallel_linear_params(k_params, 32, 16, 4)
    x4 = jax.random.normal(k_x, (4, 128, 32, 4), dtype=jnp.float32)
    y4 = jax.block_until_ready(parallel_linear(x4, W4, b4))
    _check(y4, x4, W4, b4)

    print("KERNEL_OK")
</pallas_src>

<mosaic_0001>
module attributes {stable_mosaic.version = 11 : i64} {
  func.func @_blockdiag_kernel(%arg0: i32, %arg1: memref<16x128xf32, #tpu.memory_space<vmem>>, %arg2: memref<128x128xf32, #tpu.memory_space<vmem>>, %arg3: memref<1x128xf32, #tpu.memory_space<vmem>>, %arg4: memref<16x128xf32, #tpu.memory_space<vmem>>) attributes {dimension_semantics = [#tpu.dimension_semantics<parallel>], iteration_bounds = array<i64: 1>, scalar_prefetch = 0 : i64, scratch_operands = 0 : i64, tpu.core_type = #tpu.core_type<tc>, window_params = [{transform_indices = @transform_0, window_bounds = array<i64: 16, 128>}, {pipeline_mode = #tpu.pipeline_mode<synchronous>, transform_indices = @transform_1, window_bounds = array<i64: 128, 128>}, {pipeline_mode = #tpu.pipeline_mode<synchronous>, transform_indices = @transform_2, window_bounds = array<i64: 1, 128>}, {transform_indices = @transform_3, window_bounds = array<i64: 16, 128>}]} {
    %c0 = arith.constant 0 : index
    %c0_0 = arith.constant 0 : index
    %0 = vector.load %arg1[%c0, %c0_0] : memref<16x128xf32, #tpu.memory_space<vmem>>, vector<16x128xf32>
    %c0_1 = arith.constant 0 : index
    %c0_2 = arith.constant 0 : index
    %1 = vector.load %arg2[%c0_1, %c0_2] : memref<128x128xf32, #tpu.memory_space<vmem>>, vector<128x128xf32>
    %cst = arith.constant dense<0.000000e+00> : vector<16x128xf32>
    %2 = tpu.matmul %0, %1, %cst {dimension_numbers = #tpu.dot_dimension_numbers<[1], [0], [0], [1], [0, 0, 1, 1], [], []>} : vector<16x128xf32>, vector<128x128xf32>, vector<16x128xf32> -> vector<16x128xf32>
    %c0_3 = arith.constant 0 : index
    %c0_4 = arith.constant 0 : index
    %3 = vector.load %arg3[%c0_3, %c0_4] : memref<1x128xf32, #tpu.memory_space<vmem>>, vector<1x128xf32>
    %4 = vector.broadcast %3 : vector<1x128xf32> to vector<16x128xf32>
    %5 = arith.addf %2, %4 : vector<16x128xf32>
    %c0_5 = arith.constant 0 : index
    %c0_6 = arith.constant 0 : index
    %6 = vector.load %arg4[%c0_5, %c0_6] : memref<16x128xf32, #tpu.memory_space<vmem>>, vector<16x128xf32>
    tpu.vector_store %arg4[%c0_5, %c0_6], %5 {strides = array<i32>} : memref<16x128xf32, #tpu.memory_space<vmem>>, vector<16x128xf32>,
    return
  }
  func.func @transform_0(%arg0: i32) -> (i32, i32) {
    %c0_i32 = arith.constant 0 : i32
    %c0_i32_0 = arith.constant 0 : i32
    return %arg0, %c0_i32 : i32, i32
  }
  func.func @transform_1(%arg0: i32) -> (i32, i32) {
    %c0_i32 = arith.constant 0 : i32
    %c0_i32_0 = arith.constant 0 : i32
    %c0_i32_1 = arith.constant 0 : i32
    return %c0_i32, %c0_i32_0 : i32, i32
  }
  func.func @transform_2(%arg0: i32) -> (i32, i32) {
    %c0_i32 = arith.constant 0 : i32
    %c0_i32_0 = arith.constant 0 : i32
    %c0_i32_1 = arith.constant 0 : i32
    return %c0_i32, %c0_i32_0 : i32, i32
  }
  func.func @transform_3(%arg0: i32) -> (i32, i32) {
    %c0_i32 = arith.constant 0 : i32
    %c0_i32_0 = arith.constant 0 : i32
    return %arg0, %c0_i32 : i32, i32
  }
}

</mosaic_0001>

<llo_original>
// kernel: parallel_linear.1
$region0: #{parallel_linear.1}
  #allocation0 [shape = 'u32[]', space=smem, size = 0x4, offset = 0x4, fixed_abs, tag = 'smem constant byte address 0x4 - core index']
  #allocation1 [shape = 'u32[144,128]{1,0:T(1,128)}', space=vmem, size = 0x12000, scoped, tag = 'internal scratch']
  %s0 = inlined_call_operand.vmem [shape: f32[16,128], index: 0, kind: input, shape index: {}]
  %s1 = inlined_call_operand.vmem [shape: f32[128,128], index: 1, kind: input, shape index: {}]
  %s2 = inlined_call_operand.vmem [shape: f32[1,128], index: 2, kind: input, shape index: {}]
  %s3 = inlined_call_operand.vmem [shape: f32[16,128], index: 3, kind: output, shape index: {}]
  %s4 = sld [smem:[#allocation0]]
  $region22: #{parallel_linear.1} parent=0
    _
  %s6 = ssub.s32 1, %s4
  %s7 = scalar_select 0, %s6, %s4
  // Predicated region
  $region2: #{parallel_linear.1} parent=0 // pred_check
    _
  $region3: #{parallel_linear.1} parent=0 // pred_check_branch
    %9 = sbr.rel (0) target = $region5
  $region4: #{parallel_linear.1} parent=0 // pred_region
    _
  $region5: #{parallel_linear.1} parent=0 // pred_fallthru
    _
  // Predicated region
  $region6: #{parallel_linear.1} parent=0 // pred_check
    _
  $region7: #{parallel_linear.1} parent=0 // pred_check_branch
    %11 = sbr.rel (0) target = $region9
  $region8: #{parallel_linear.1} parent=0 // pred_region
    _
  $region9: #{parallel_linear.1} parent=0 // pred_fallthru
    _
  // Predicated region
  $region10: #{parallel_linear.1} parent=0 // pred_check
    _
  $region11: #{parallel_linear.1} parent=0 // pred_check_branch
    %13 = sbr.rel (0) target = $region13
  $region12: #{parallel_linear.1} parent=0 // pred_region
    _
  $region13: #{parallel_linear.1} parent=0 // pred_fallthru
    _
  %v14 = vld [vmem:[%s0] sm:$0xff]
  %v15 = vld [vmem:[%s0 + $0x8] sm:$0xff]
  %v16 = vld [vmem:[%s1] sm:$0xff]
  %v17 = vld [vmem:[%s1 + $0x8] sm:$0xff]
  %v18 = vld [vmem:[%s1 + $0x10] sm:$0xff]
  %v19 = vld [vmem:[%s1 + $0x18] sm:$0xff]
  %v20 = vld [vmem:[%s1 + $0x20] sm:$0xff]
  %v21 = vld [vmem:[%s1 + $0x28] sm:$0xff]
  %v22 = vld [vmem:[%s1 + $0x30] sm:$0xff]
  %v23 = vld [vmem:[%s1 + $0x38] sm:$0xff]
  %v24 = vld [vmem:[%s1 + $0x40] sm:$0xff]
  %v25 = vld [vmem:[%s1 + $0x48] sm:$0xff]
  %v26 = vld [vmem:[%s1 + $0x50] sm:$0xff]
  %v27 = vld [vmem:[%s1 + $0x58] sm:$0xff]
  %v28 = vld [vmem:[%s1 + $0x60] sm:$0xff]
  %v29 = vld [vmem:[%s1 + $0x68] sm:$0xff]
  %v30 = vld [vmem:[%s1 + $0x70] sm:$0xff]
  %v31 = vld [vmem:[%s1 + $0x78] sm:$0xff]
  %v32 = vld [vmem:[%s2] sm:$0x1]
  %v34 = vlaneseq
  %v35 = vshrl.u32 %v34, 7
  %v36 = vsub.s32 0, %v35
  %v37 = vrot.slane %v32, %v36
  %39 = vmatprep.subr.mxu0 0.0
  %40 = vmatpush1.msra.mxu0 %v16
  %41 = vmatprep.subr.mxu0 0.0
  %42 = vmatpush1.msra.mxu0 %v17
  %43 = vmatprep.subr.mxu0 0.0
  %44 = vmatpush1.msra.mxu0 %v18
  %45 = vmatprep.subr.mxu0 0.0
  %46 = vmatpush1.msra.mxu0 %v19
  %47 = vmatprep.subr.mxu0 0.0
  %48 = vmatpush1.msra.mxu0 %v20
  %49 = vmatprep.subr.mxu0 0.0
  %50 = vmatpush1.msra.mxu0 %v21
  %51 = vmatprep.subr.mxu0 0.0
  %52 = vmatpush1.msra.mxu0 %v22
  %53 = vmatprep.subr.mxu0 0.0
  %54 = vmatpush1.msra.mxu0 %v23
  %55 = vmatprep.subr.mxu0 0.0
  %56 = vmatpush1.msra.mxu0 %v24
  %57 = vmatprep.subr.mxu0 0.0
  %58 = vmatpush1.msra.mxu0 %v25
  %59 = vmatprep.subr.mxu0 0.0
  %60 = vmatpush1.msra.mxu0 %v26
  %61 = vmatprep.subr.mxu0 0.0
  %62 = vmatpush1.msra.mxu0 %v27
  %63 = vmatprep.subr.mxu0 0.0
  %64 = vmatpush1.msra.mxu0 %v28
  %65 = vmatprep.subr.mxu0 0.0
  %66 = vmatpush1.msra.mxu0 %v29
  %67 = vmatprep.subr.mxu0 0.0
  %68 = vmatpush1.msra.mxu0 %v30
  %69 = vmatprep.subr.mxu0 0.0
  %70 = vmatpush1.msra.mxu0 %v31
  %71 = vmatprep.subr.mxu0 0.0
  %72 = vmatpush1.msra.mxu0 0.0
  %73 = vmatprep.subr.mxu0 0.0
  %74 = vmatpush1.msra.mxu0 0.0
  %75 = vmatprep.subr.mxu0 0.0
  %76 = vmatpush1.msra.mxu0 0.0
  %77 = vmatprep.subr.mxu0 0.0
  %78 = vmatpush1.msra.mxu0 0.0
  %79 = vmatprep.subr.mxu0 0.0
  %80 = vmatpush1.msra.mxu0 0.0
  %81 = vmatprep.subr.mxu0 0.0
  %82 = vmatpush1.msra.mxu0 0.0
  %83 = vmatprep.subr.mxu0 0.0
  %84 = vmatpush1.msra.mxu0 0.0
  %85 = vmatprep.subr.mxu0 0.0
  %86 = vmatpush1.msra.mxu0 0.0
  %87 = vmatprep.subr.mxu0 0.0
  %88 = vmatpush1.msra.mxu0 0.0
  %89 = vmatprep.subr.mxu0 0.0
  %90 = vmatpush1.msra.mxu0 0.0
  %91 = vmatprep.subr.mxu0 0.0
  %92 = vmatpush1.msra.mxu0 0.0
  %93 = vmatprep.subr.mxu0 0.0
  %94 = vmatpush1.msra.mxu0 0.0
  %95 = vmatprep.subr.mxu0 0.0
  %96 = vmatpush1.msra.mxu0 0.0
  %97 = vmatprep.subr.mxu0 0.0
  %98 = vmatpush1.msra.mxu0 0.0
  %99 = vmatprep.subr.mxu0 0.0
  %100 = vmatpush1.msra.mxu0 0.0
  %101 = vmatprep.subr.mxu0 0.0
  %102 = vmatpush1.msra.mxu0 0.0
  %103 = vmatprep.mubr.f32.mxu0 0.0
  %104 = vmatmul.mubr.f32.gmra.mrb[0].mxu0 %v14
  %v105 = vpop.f32.mrb[0].mxu0
  %v106 = vadd.f32 %v37, %v105
  %v107 = vpop.f32.mrb[0].mxu0
  %108 = vmatprep.mubr.f32.mxu0 0.0
  %109 = vmatmul.mubr.f32.gmra.mrb[0].mxu0 %v15
  %v110 = vpop.f32.mrb[0].mxu0
  %v111 = vadd.f32 %v37, %v110
  %v112 = vpop.f32.mrb[0].mxu0
  %113 = vdwg.mxu0
  %114 = vst [vmem:[%s3] sm:$0xff] %v106
  %115 = vst [vmem:[%s3 + $0x8] sm:$0xff] %v111
  // Predicated region
  $region14: #{parallel_linear.1} parent=0 // pred_check
    _
  $region15: #{parallel_linear.1} parent=0 // pred_check_branch
    %117 = sbr.rel (0) target = $region17
  $region16: #{parallel_linear.1} parent=0 // pred_region
    _
  $region17: #{parallel_linear.1} parent=0 // pred_fallthru
    _
  // Predicated region
  $region18: #{parallel_linear.1} parent=0 // pred_check
    _
  $region19: #{parallel_linear.1} parent=0 // pred_check_branch
    %119 = sbr.rel (0) target = $region21
  $region20: #{parallel_linear.1} parent=0 // pred_region
    _
  $region21: #{parallel_linear.1} parent=0 // pred_fallthru
    _

</llo_original>
